<compile_context>
chip_gen: v5e
topology: v5e:2x2
jax: 0.10.0
libtpu: 0.0.40
codegen_flags: <defaults>
</compile_context>

<pallas_src>
import jax
import jax.numpy as jnp
from jax.experimental import pallas as pl
from jax.experimental.pallas import tpu as pltpu

# ----------------------------- model dims (small) -----------------------------
BATCH = 2
SEQ = 8
HIDDEN = 32          # "n" = config.hidden_size (small synthetic stand-in)
NUM_HEADS = 4
HEAD_DIM = HIDDEN // NUM_HEADS
FFN = 64
VOCAB = 100
NUM_TYPES = 2
NUM_LABELS = 14
PAD_LABELS = 128     # lane-dense classifier output; sliced back to NUM_LABELS


# ------------------------------- Pallas kernel --------------------------------
def bert_class_kernel(x_ref, bias_ref,
                      wqkv_ref, wop_ref, w1_ref, w2_ref, wcls_ref,
                      bqkv_ref, b1_ref, bcls_ref, vec_ref,
                      out_ref):
    """Whole batch in one invocation: full encoder layer + pooler + classifier."""
    B, S, H = BATCH, SEQ, HIDDEN
    bf16 = jnp.bfloat16

    x = x_ref[...]                         # [B, S, H] f32 embedded tokens
    bias = bias_ref[...]                   # [B, 1, S] additive attention-mask bias

    # packed [1, H] vectors (f32): LN gains/biases and small biases
    vec = vec_ref[...]                     # [16, H]
    ln0_g, ln0_b = vec[0:1], vec[1:2]
    b_o = vec[2:3]
    ln1_g, ln1_b = vec[3:4], vec[4:5]
    b_f2 = vec[5:6]
    ln2_g, ln2_b = vec[6:7], vec[7:8]
    b_p = vec[8:9]

    def layer_norm(h, g, b):
        mu = jnp.mean(h, axis=-1, keepdims=True)
        var = jnp.mean((h - mu) ** 2, axis=-1, keepdims=True)
        return (h - mu) * jax.lax.rsqrt(var + 1e-12) * g + b

    # ----- embedding LayerNorm on the flattened (B*S, H) slab -----
    x2 = layer_norm(x.reshape(B * S, H), ln0_g, ln0_b)            # f32 [B*S, H]

    # ----- fused QKV projection: one MXU pass, bf16 operands, f32 accumulation -----
    qkv = jnp.dot(x2.astype(bf16), wqkv_ref[...],
                  preferred_element_type=jnp.float32) + bqkv_ref[...]   # [B*S, 3H]
    q = qkv[:, 0:H].reshape(B, S, H)
    k = qkv[:, H:2 * H].reshape(B, S, H)
    v = qkv[:, 2 * H:3 * H].reshape(B, S, H)

    # ----- multi-head self-attention, batched over B (static unroll over heads) -----
    scale = 1.0 / (HEAD_DIM ** 0.5)
    ctx_parts = []
    for h in range(NUM_HEADS):
        sl = slice(h * HEAD_DIM, (h + 1) * HEAD_DIM)
        qh = q[:, :, sl].astype(bf16)
        kh = k[:, :, sl].astype(bf16)
        vh = v[:, :, sl].astype(bf16)
        s = jnp.einsum('bqd,bkd->bqk', qh, kh,
                       preferred_element_type=jnp.float32) * scale + bias   # [B,S,S]
        s = s - jnp.max(s, axis=-1, keepdims=True)
        p = jnp.exp(s)
        p = p * pl.reciprocal(jnp.sum(p, axis=-1, keepdims=True), approx=True)
        ctx_parts.append(jnp.einsum('bqk,bkd->bqd', p.astype(bf16), vh,
                                    preferred_element_type=jnp.float32))
    ctx = jnp.concatenate(ctx_parts, axis=-1).reshape(B * S, H)             # [B*S, H]

    # attention output projection (wop lanes [0:H]) + residual + LN
    wop = wop_ref[...]                                                      # [H, 2H] bf16
    attn = jnp.dot(ctx.astype(bf16), wop[:, 0:H],
                   preferred_element_type=jnp.float32) + b_o
    x2 = layer_norm(x2 + attn, ln1_g, ln1_b)

    # ----- feed-forward (GELU, tanh approximation), f32 elementwise math -----
    hdn = jnp.dot(x2.astype(bf16), w1_ref[...],
                  preferred_element_type=jnp.float32) + b1_ref[...]
    hdn = 0.5 * hdn * (1.0 + jnp.tanh(0.7978845608028654 *
                                      (hdn + 0.044715 * hdn * hdn * hdn)))
    ffn = jnp.dot(hdn.astype(bf16), w2_ref[...],
                  preferred_element_type=jnp.float32) + b_f2
    x2 = layer_norm(x2 + ffn, ln2_g, ln2_b)

    # ----- BERT pooler on the batched CLS slab: tanh(Linear(h[:, 0])) -----
    cls = x2.reshape(B, S, H)[:, 0, :]                                      # [B, H]
    pooled = jnp.tanh(jnp.dot(cls.astype(bf16), wop[:, H:2 * H],
                              preferred_element_type=jnp.float32) + b_p)

    # TODO(synk): torch.nn.Dropout(0.1) is identity in eval mode; train-mode RNG drop omitted.

    # ----- classifier head: Linear(n, num_labels), lane-padded to 128 -----
    logits = jnp.dot(pooled.astype(bf16), wcls_ref[...],
                     preferred_element_type=jnp.float32) + bcls_ref[...]    # [B, 128]
    out_ref[...] = logits.astype(out_ref.dtype)


# --------------------------------- wrapper -------------------------------------
@jax.jit
def bert_class_forward(ids, mask, token_type_ids, params):
    B, S = ids.shape
    bf16 = jnp.bfloat16

    # ----- glue: embedding lookups (gathers) in plain JAX -----
    pos = jnp.arange(S, dtype=jnp.int32)
    x = (jnp.take(params["word_emb"], ids, axis=0)
         + jnp.take(params["pos_emb"], pos, axis=0)[None, :, :]
         + jnp.take(params["type_emb"], token_type_ids, axis=0)).astype(jnp.float32)  # [B,S,H]

    # additive attention-mask bias: 0 where attended, -1e9 where masked
    bias = ((1.0 - mask.astype(jnp.float32)) * -1e9)[:, None, :]                      # [B,1,S]

    # ----- pack weights into a few lane-dense slabs (bf16 MXU operands) -----
    w_qkv = jnp.concatenate([params["wq"], params["wk"], params["wv"]], axis=1).astype(bf16)  # [H,3H]
    w_op = jnp.concatenate([params["wo"], params["wp"]], axis=1).astype(bf16)                 # [H,2H]
    w_1 = params["w1"].astype(bf16)                                                           # [H,FFN]
    w_2 = params["w2"].astype(bf16)                                                           # [FFN,H]
    w_cls = jnp.zeros((HIDDEN, PAD_LABELS), bf16).at[:, :NUM_LABELS].set(
        params["wc"].astype(bf16))                                                            # [H,128]

    b_qkv = jnp.concatenate([params["bq"], params["bk"], params["bv"]], axis=1)               # [1,3H]
    b_1 = params["b1"]                                                                        # [1,FFN]
    b_cls = jnp.zeros((1, PAD_LABELS), jnp.float32).at[:, :NUM_LABELS].set(params["bc"])      # [1,128]

    vec = jnp.zeros((16, HIDDEN), jnp.float32)
    vec = vec.at[0].set(params["ln0_g"][0]).at[1].set(params["ln0_b"][0])
    vec = vec.at[2].set(params["bo"][0])
    vec = vec.at[3].set(params["ln1_g"][0]).at[4].set(params["ln1_b"][0])
    vec = vec.at[5].set(params["b2"][0])
    vec = vec.at[6].set(params["ln2_g"][0]).at[7].set(params["ln2_b"][0])
    vec = vec.at[8].set(params["bp"][0])

    # Single invocation (no grid): whole batch + all packed weights live in VMEM;
    # each input is DMA'd exactly once.
    logits_pad = pl.pallas_call(
        bert_class_kernel,
        out_shape=jax.ShapeDtypeStruct((B, PAD_LABELS), jnp.float32),
    )(x, bias, w_qkv, w_op, w_1, w_2, w_cls, b_qkv, b_1, b_cls, vec)

    return logits_pad[:, :NUM_LABELS]                                                  # [B, 14]


# ------------------------- deterministic parameter init -------------------------
def init_params(key):
    ks = jax.random.split(key, 24)

    def nrm(k, shape, scale=0.02):
        return jax.random.normal(k, shape, dtype=jnp.float32) * scale

    p = {
        "word_emb": nrm(ks[0], (VOCAB, HIDDEN)),
        "pos_emb": nrm(ks[1], (SEQ, HIDDEN)),
        "type_emb": nrm(ks[2], (NUM_TYPES, HIDDEN)),
        "ln0_g": jnp.ones((1, HIDDEN), jnp.float32),
        "ln0_b": jnp.zeros((1, HIDDEN), jnp.float32),
        "wq": nrm(ks[3], (HIDDEN, HIDDEN)), "bq": jnp.zeros((1, HIDDEN), jnp.float32),
        "wk": nrm(ks[4], (HIDDEN, HIDDEN)), "bk": jnp.zeros((1, HIDDEN), jnp.float32),
        "wv": nrm(ks[5], (HIDDEN, HIDDEN)), "bv": jnp.zeros((1, HIDDEN), jnp.float32),
        "wo": nrm(ks[6], (HIDDEN, HIDDEN)), "bo": jnp.zeros((1, HIDDEN), jnp.float32),
        "ln1_g": jnp.ones((1, HIDDEN), jnp.float32),
        "ln1_b": jnp.zeros((1, HIDDEN), jnp.float32),
        "w1": nrm(ks[7], (HIDDEN, FFN)), "b1": jnp.zeros((1, FFN), jnp.float32),
        "w2": nrm(ks[8], (FFN, HIDDEN)), "b2": jnp.zeros((1, HIDDEN), jnp.float32),
        "ln2_g": jnp.ones((1, HIDDEN), jnp.float32),
        "ln2_b": jnp.zeros((1, HIDDEN), jnp.float32),
        "wp": nrm(ks[9], (HIDDEN, HIDDEN)), "bp": jnp.zeros((1, HIDDEN), jnp.float32),
        "wc": nrm(ks[10], (HIDDEN, NUM_LABELS)), "bc": jnp.zeros((1, NUM_LABELS), jnp.float32),
    }
    return p


if __name__ == "__main__":
    key = jax.random.PRNGKey(0)
    pkey, ikey = jax.random.split(key)
    params = init_params(pkey)

    ids = jax.random.randint(ikey, (BATCH, SEQ), 0, VOCAB, dtype=jnp.int32)
    mask = jnp.ones((BATCH, SEQ), dtype=jnp.int32).at[1, 6:].set(0)   # pad last 2 tokens of ex 1
    token_type_ids = jnp.zeros((BATCH, SEQ), dtype=jnp.int32)

    logits = bert_class_forward(ids, mask, token_type_ids, params)
    jax.block_until_ready(logits)

    assert logits.shape == (BATCH, NUM_LABELS)
    assert bool(jnp.all(jnp.isfinite(logits)))
    print("KERNEL_OK")
</pallas_src>

<mosaic_0001>
module attributes {stable_mosaic.version = 11 : i64} {
  func.func @bert_class_kernel(%arg0: memref<2x8x32xf32, #tpu.memory_space<vmem>>, %arg1: memref<2x1x8xf32, #tpu.memory_space<vmem>>, %arg2: memref<32x96xbf16, #tpu.memory_space<vmem>>, %arg3: memref<32x64xbf16, #tpu.memory_space<vmem>>, %arg4: memref<32x64xbf16, #tpu.memory_space<vmem>>, %arg5: memref<64x32xbf16, #tpu.memory_space<vmem>>, %arg6: memref<32x128xbf16, #tpu.memory_space<vmem>>, %arg7: memref<1x96xf32, #tpu.memory_space<vmem>>, %arg8: memref<1x64xf32, #tpu.memory_space<vmem>>, %arg9: memref<1x128xf32, #tpu.memory_space<vmem>>, %arg10: memref<16x32xf32, #tpu.memory_space<vmem>>, %arg11: memref<2x128xf32, #tpu.memory_space<vmem>>) attributes {dimension_semantics = [], scalar_prefetch = 0 : i64, scratch_operands = 0 : i64, tpu.core_type = #tpu.core_type<tc>} {
    %c0 = arith.constant 0 : index
    %c0_0 = arith.constant 0 : index
    %c0_1 = arith.constant 0 : index
    %0 = vector.load %arg0[%c0, %c0_0, %c0_1] : memref<2x8x32xf32, #tpu.memory_space<vmem>>, vector<2x8x32xf32>
    %c0_2 = arith.constant 0 : index
    %c0_3 = arith.constant 0 : index
    %c0_4 = arith.constant 0 : index
    %1 = vector.load %arg1[%c0_2, %c0_3, %c0_4] : memref<2x1x8xf32, #tpu.memory_space<vmem>>, vector<2x1x8xf32>
    %c0_5 = arith.constant 0 : index
    %c0_6 = arith.constant 0 : index
    %2 = vector.load %arg10[%c0_5, %c0_6] : memref<16x32xf32, #tpu.memory_space<vmem>>, vector<16x32xf32>
    %3 = vector.extract_strided_slice %2 {offsets = [0, 0], sizes = [1, 32], strides = [1, 1]} : vector<16x32xf32> to vector<1x32xf32>
    %4 = vector.extract_strided_slice %2 {offsets = [1, 0], sizes = [1, 32], strides = [1, 1]} : vector<16x32xf32> to vector<1x32xf32>
    %5 = vector.extract_strided_slice %2 {offsets = [2, 0], sizes = [1, 32], strides = [1, 1]} : vector<16x32xf32> to vector<1x32xf32>
    %6 = vector.extract_strided_slice %2 {offsets = [3, 0], sizes = [1, 32], strides = [1, 1]} : vector<16x32xf32> to vector<1x32xf32>
    %7 = vector.extract_strided_slice %2 {offsets = [4, 0], sizes = [1, 32], strides = [1, 1]} : vector<16x32xf32> to vector<1x32xf32>
    %8 = vector.extract_strided_slice %2 {offsets = [5, 0], sizes = [1, 32], strides = [1, 1]} : vector<16x32xf32> to vector<1x32xf32>
    %9 = vector.extract_strided_slice %2 {offsets = [6, 0], sizes = [1, 32], strides = [1, 1]} : vector<16x32xf32> to vector<1x32xf32>
    %10 = vector.extract_strided_slice %2 {offsets = [7, 0], sizes = [1, 32], strides = [1, 1]} : vector<16x32xf32> to vector<1x32xf32>
    %11 = vector.extract_strided_slice %2 {offsets = [8, 0], sizes = [1, 32], strides = [1, 1]} : vector<16x32xf32> to vector<1x32xf32>
    %12 = vector.shape_cast %0 : vector<2x8x32xf32> to vector<16x32xf32>
    %cst = arith.constant dense<0.000000e+00> : vector<16xf32>
    %13 = vector.multi_reduction <add>, %12, %cst [1] : vector<16x32xf32> to vector<16xf32>
    %14 = vector.shape_cast %13 : vector<16xf32> to vector<16x1xf32>
    %cst_7 = arith.constant 3.200000e+01 : f32
    %15 = vector.broadcast %cst_7 : f32 to vector<16x1xf32>
    %16 = arith.divf %14, %15 : vector<16x1xf32>
    %17 = vector.broadcast %16 : vector<16x1xf32> to vector<16x32xf32>
    %18 = arith.subf %12, %17 : vector<16x32xf32>
    %19 = arith.mulf %18, %18 : vector<16x32xf32>
    %cst_8 = arith.constant dense<0.000000e+00> : vector<16xf32>
    %20 = vector.multi_reduction <add>, %19, %cst_8 [1] : vector<16x32xf32> to vector<16xf32>
    %21 = vector.shape_cast %20 : vector<16xf32> to vector<16x1xf32>
    %cst_9 = arith.constant 3.200000e+01 : f32
    %22 = vector.broadcast %cst_9 : f32 to vector<16x1xf32>
    %23 = arith.divf %21, %22 : vector<16x1xf32>
    %24 = vector.broadcast %16 : vector<16x1xf32> to vector<16x32xf32>
    %25 = arith.subf %12, %24 : vector<16x32xf32>
    %cst_10 = arith.constant 9.99999996E-13 : f32
    %26 = vector.broadcast %cst_10 : f32 to vector<16x1xf32>
    %27 = arith.addf %23, %26 : vector<16x1xf32>
    %28 = math.rsqrt %27 : vector<16x1xf32>
    %29 = vector.broadcast %28 : vector<16x1xf32> to vector<16x32xf32>
    %30 = arith.mulf %25, %29 : vector<16x32xf32>
    %31 = vector.broadcast %3 : vector<1x32xf32> to vector<16x32xf32>
    %32 = arith.mulf %30, %31 : vector<16x32xf32>
    %33 = vector.broadcast %4 : vector<1x32xf32> to vector<16x32xf32>
    %34 = arith.addf %32, %33 : vector<16x32xf32>
    %35 = arith.truncf %34 : vector<16x32xf32> to vector<16x32xbf16>
    %c0_11 = arith.constant 0 : index
    %c0_12 = arith.constant 0 : index
    %36 = vector.load %arg2[%c0_11, %c0_12] : memref<32x96xbf16, #tpu.memory_space<vmem>>, vector<32x96xbf16>
    %cst_13 = arith.constant dense<0.000000e+00> : vector<16x96xf32>
    %37 = tpu.matmul %35, %36, %cst_13 {dimension_numbers = #tpu.dot_dimension_numbers<[1], [0], [0], [1], [0, 0, 1, 1], [], []>} : vector<16x32xbf16>, vector<32x96xbf16>, vector<16x96xf32> -> vector<16x96xf32>
    %c0_14 = arith.constant 0 : index
    %c0_15 = arith.constant 0 : index
    %38 = vector.load %arg7[%c0_14, %c0_15] : memref<1x96xf32, #tpu.memory_space<vmem>>, vector<1x96xf32>
    %39 = vector.broadcast %38 : vector<1x96xf32> to vector<16x96xf32>
    %40 = arith.addf %37, %39 : vector<16x96xf32>
    %41 = vector.extract_strided_slice %40 {offsets = [0, 0], sizes = [16, 32], strides = [1, 1]} : vector<16x96xf32> to vector<16x32xf32>
    %42 = vector.shape_cast %41 : vector<16x32xf32> to vector<2x8x32xf32>
    %43 = vector.extract_strided_slice %40 {offsets = [0, 32], sizes = [16, 32], strides = [1, 1]} : vector<16x96xf32> to vector<16x32xf32>
    %44 = vector.shape_cast %43 : vector<16x32xf32> to vector<2x8x32xf32>
    %45 = vector.extract_strided_slice %40 {offsets = [0, 64], sizes = [16, 32], strides = [1, 1]} : vector<16x96xf32> to vector<16x32xf32>
    %46 = vector.shape_cast %45 : vector<16x32xf32> to vector<2x8x32xf32>
    %47 = vector.extract_strided_slice %42 {offsets = [0, 0, 0], sizes = [2, 8, 8], strides = [1, 1, 1]} : vector<2x8x32xf32> to vector<2x8x8xf32>
    %48 = arith.truncf %47 : vector<2x8x8xf32> to vector<2x8x8xbf16>
    %49 = vector.extract_strided_slice %44 {offsets = [0, 0, 0], sizes = [2, 8, 8], strides = [1, 1, 1]} : vector<2x8x32xf32> to vector<2x8x8xf32>
    %50 = arith.truncf %49 : vector<2x8x8xf32> to vector<2x8x8xbf16>
    %51 = vector.extract_strided_slice %46 {offsets = [0, 0, 0], sizes = [2, 8, 8], strides = [1, 1, 1]} : vector<2x8x32xf32> to vector<2x8x8xf32>
    %52 = arith.truncf %51 : vector<2x8x8xf32> to vector<2x8x8xbf16>
    "tpu.trace_start"() <{level = 10 : i32, message = "bqd,bkd->bqk"}> : () -> ()
    %cst_16 = arith.constant dense<0.000000e+00> : vector<2x8x8xf32>
    %53 = tpu.matmul %48, %50, %cst_16 {dimension_numbers = #tpu.dot_dimension_numbers<[2], [2], [1], [1], [0, 0, 0, 1, 1, 1], [0], [0]>} : vector<2x8x8xbf16>, vector<2x8x8xbf16>, vector<2x8x8xf32> -> vector<2x8x8xf32>
    "tpu.trace_stop"() : () -> ()
    %cst_17 = arith.constant 0.353553385 : f32
    %54 = vector.broadcast %cst_17 : f32 to vector<2x8x8xf32>
    %55 = arith.mulf %53, %54 : vector<2x8x8xf32>
    %56 = vector.broadcast %1 : vector<2x1x8xf32> to vector<2x8x8xf32>
    %57 = arith.addf %55, %56 : vector<2x8x8xf32>
    %cst_18 = arith.constant dense<0xFF800000> : vector<2x8xf32>
    %58 = vector.multi_reduction <maximumf>, %57, %cst_18 [2] : vector<2x8x8xf32> to vector<2x8xf32>
    %59 = vector.shape_cast %58 : vector<2x8xf32> to vector<2x8x1xf32>
    %60 = vector.broadcast %59 : vector<2x8x1xf32> to vector<2x8x8xf32>
    %61 = arith.subf %57, %60 : vector<2x8x8xf32>
    %62 = math.exp %61 : vector<2x8x8xf32>
    %cst_19 = arith.constant dense<0.000000e+00> : vector<2x8xf32>
    %63 = vector.multi_reduction <add>, %62, %cst_19 [2] : vector<2x8x8xf32> to vector<2x8xf32>
    %64 = vector.shape_cast %63 : vector<2x8xf32> to vector<2x8x1xf32>
    %65 = tpu.reciprocal %64 {approx = true} : vector<2x8x1xf32> -> vector<2x8x1xf32>
    %66 = vector.broadcast %65 : vector<2x8x1xf32> to vector<2x8x8xf32>
    %67 = arith.mulf %62, %66 : vector<2x8x8xf32>
    %68 = arith.truncf %67 : vector<2x8x8xf32> to vector<2x8x8xbf16>
    "tpu.trace_start"() <{level = 10 : i32, message = "bqk,bkd->bqd"}> : () -> ()
    %cst_20 = arith.constant dense<0.000000e+00> : vector<2x8x8xf32>
    %69 = tpu.matmul %68, %52, %cst_20 {dimension_numbers = #tpu.dot_dimension_numbers<[2], [1], [1], [2], [0, 0, 0, 1, 1, 2], [0], [0]>} : vector<2x8x8xbf16>, vector<2x8x8xbf16>, vector<2x8x8xf32> -> vector<2x8x8xf32>
    "tpu.trace_stop"() : () -> ()
    %70 = vector.extract_strided_slice %42 {offsets = [0, 0, 8], sizes = [2, 8, 8], strides = [1, 1, 1]} : vector<2x8x32xf32> to vector<2x8x8xf32>
    %71 = arith.truncf %70 : vector<2x8x8xf32> to vector<2x8x8xbf16>
    %72 = vector.extract_strided_slice %44 {offsets = [0, 0, 8], sizes = [2, 8, 8], strides = [1, 1, 1]} : vector<2x8x32xf32> to vector<2x8x8xf32>
    %73 = arith.truncf %72 : vector<2x8x8xf32> to vector<2x8x8xbf16>
    %74 = vector.extract_strided_slice %46 {offsets = [0, 0, 8], sizes = [2, 8, 8], strides = [1, 1, 1]} : vector<2x8x32xf32> to vector<2x8x8xf32>
    %75 = arith.truncf %74 : vector<2x8x8xf32> to vector<2x8x8xbf16>
    "tpu.trace_start"() <{level = 10 : i32, message = "bqd,bkd->bqk"}> : () -> ()
    %cst_21 = arith.constant dense<0.000000e+00> : vector<2x8x8xf32>
    %76 = tpu.matmul %71, %73, %cst_21 {dimension_numbers = #tpu.dot_dimension_numbers<[2], [2], [1], [1], [0, 0, 0, 1, 1, 1], [0], [0]>} : vector<2x8x8xbf16>, vector<2x8x8xbf16>, vector<2x8x8xf32> -> vector<2x8x8xf32>
    "tpu.trace_stop"() : () -> ()
    %cst_22 = arith.constant 0.353553385 : f32
    %77 = vector.broadcast %cst_22 : f32 to vector<2x8x8xf32>
    %78 = arith.mulf %76, %77 : vector<2x8x8xf32>
    %79 = vector.broadcast %1 : vector<2x1x8xf32> to vector<2x8x8xf32>
    %80 = arith.addf %78, %79 : vector<2x8x8xf32>
    %cst_23 = arith.constant dense<0xFF800000> : vector<2x8xf32>
    %81 = vector.multi_reduction <maximumf>, %80, %cst_23 [2] : vector<2x8x8xf32> to vector<2x8xf32>
    %82 = vector.shape_cast %81 : vector<2x8xf32> to vector<2x8x1xf32>
    %83 = vector.broadcast %82 : vector<2x8x1xf32> to vector<2x8x8xf32>
    %84 = arith.subf %80, %83 : vector<2x8x8xf32>
    %85 = math.exp %84 : vector<2x8x8xf32>
    %cst_24 = arith.constant dense<0.000000e+00> : vector<2x8xf32>
    %86 = vector.multi_reduction <add>, %85, %cst_24 [2] : vector<2x8x8xf32> to vector<2x8xf32>
    %87 = vector.shape_cast %86 : vector<2x8xf32> to vector<2x8x1xf32>
    %88 = tpu.reciprocal %87 {approx = true} : vector<2x8x1xf32> -> vector<2x8x1xf32>
    %89 = vector.broadcast %88 : vector<2x8x1xf32> to vector<2x8x8xf32>
    %90 = arith.mulf %85, %89 : vector<2x8x8xf32>
    %91 = arith.truncf %90 : vector<2x8x8xf32> to vector<2x8x8xbf16>
    "tpu.trace_start"() <{level = 10 : i32, message = "bqk,bkd->bqd"}> : () -> ()
    %cst_25 = arith.constant dense<0.000000e+00> : vector<2x8x8xf32>
    %92 = tpu.matmul %91, %75, %cst_25 {dimension_numbers = #tpu.dot_dimension_numbers<[2], [1], [1], [2], [0, 0, 0, 1, 1, 2], [0], [0]>} : vector<2x8x8xbf16>, vector<2x8x8xbf16>, vector<2x8x8xf32> -> vector<2x8x8xf32>
    "tpu.trace_stop"() : () -> ()
    %93 = vector.extract_strided_slice %42 {offsets = [0, 0, 16], sizes = [2, 8, 8], strides = [1, 1, 1]} : vector<2x8x32xf32> to vector<2x8x8xf32>
    %94 = arith.truncf %93 : vector<2x8x8xf32> to vector<2x8x8xbf16>
    %95 = vector.extract_strided_slice %44 {offsets = [0, 0, 16], sizes = [2, 8, 8], strides = [1, 1, 1]} : vector<2x8x32xf32> to vector<2x8x8xf32>
    %96 = arith.truncf %95 : vector<2x8x8xf32> to vector<2x8x8xbf16>
    %97 = vector.extract_strided_slice %46 {offsets = [0, 0, 16], sizes = [2, 8, 8], strides = [1, 1, 1]} : vector<2x8x32xf32> to vector<2x8x8xf32>
    %98 = arith.truncf %97 : vector<2x8x8xf32> to vector<2x8x8xbf16>
    "tpu.trace_start"() <{level = 10 : i32, message = "bqd,bkd->bqk"}> : () -> ()
    %cst_26 = arith.constant dense<0.000000e+00> : vector<2x8x8xf32>
    %99 = tpu.matmul %94, %96, %cst_26 {dimension_numbers = #tpu.dot_dimension_numbers<[2], [2], [1], [1], [0, 0, 0, 1, 1, 1], [0], [0]>} : vector<2x8x8xbf16>, vector<2x8x8xbf16>, vector<2x8x8xf32> -> vector<2x8x8xf32>
    "tpu.trace_stop"() : () -> ()
    %cst_27 = arith.constant 0.353553385 : f32
    %100 = vector.broadcast %cst_27 : f32 to vector<2x8x8xf32>
    %101 = arith.mulf %99, %100 : vector<2x8x8xf32>
    %102 = vector.broadcast %1 : vector<2x1x8xf32> to vector<2x8x8xf32>
    %103 = arith.addf %101, %102 : vector<2x8x8xf32>
    %cst_28 = arith.constant dense<0xFF800000> : vector<2x8xf32>
    %104 = vector.multi_reduction <maximumf>, %103, %cst_28 [2] : vector<2x8x8xf32> to vector<2x8xf32>
    %105 = vector.shape_cast %104 : vector<2x8xf32> to vector<2x8x1xf32>
    %106 = vector.broadcast %105 : vector<2x8x1xf32> to vector<2x8x8xf32>
    %107 = arith.subf %103, %106 : vector<2x8x8xf32>
    %108 = math.exp %107 : vector<2x8x8xf32>
    %cst_29 = arith.constant dense<0.000000e+00> : vector<2x8xf32>
    %109 = vector.multi_reduction <add>, %108, %cst_29 [2] : vector<2x8x8xf32> to vector<2x8xf32>
    %110 = vector.shape_cast %109 : vector<2x8xf32> to vector<2x8x1xf32>
    %111 = tpu.reciprocal %110 {approx = true} : vector<2x8x1xf32> -> vector<2x8x1xf32>
    %112 = vector.broadcast %111 : vector<2x8x1xf32> to vector<2x8x8xf32>
    %113 = arith.mulf %108, %112 : vector<2x8x8xf32>
    %114 = arith.truncf %113 : vector<2x8x8xf32> to vector<2x8x8xbf16>
    "tpu.trace_start"() <{level = 10 : i32, message = "bqk,bkd->bqd"}> : () -> ()
    %cst_30 = arith.constant dense<0.000000e+00> : vector<2x8x8xf32>
    %115 = tpu.matmul %114, %98, %cst_30 {dimension_numbers = #tpu.dot_dimension_numbers<[2], [1], [1], [2], [0, 0, 0, 1, 1, 2], [0], [0]>} : vector<2x8x8xbf16>, vector<2x8x8xbf16>, vector<2x8x8xf32> -> vector<2x8x8xf32>
    "tpu.trace_stop"() : () -> ()
    %116 = vector.extract_strided_slice %42 {offsets = [0, 0, 24], sizes = [2, 8, 8], strides = [1, 1, 1]} : vector<2x8x32xf32> to vector<2x8x8xf32>
    %117 = arith.truncf %116 : vector<2x8x8xf32> to vector<2x8x8xbf16>
    %118 = vector.extract_strided_slice %44 {offsets = [0, 0, 24], sizes = [2, 8, 8], strides = [1, 1, 1]} : vector<2x8x32xf32> to vector<2x8x8xf32>
    %119 = arith.truncf %118 : vector<2x8x8xf32> to vector<2x8x8xbf16>
    %120 = vector.extract_strided_slice %46 {offsets = [0, 0, 24], sizes = [2, 8, 8], strides = [1, 1, 1]} : vector<2x8x32xf32> to vector<2x8x8xf32>
    %121 = arith.truncf %120 : vector<2x8x8xf32> to vector<2x8x8xbf16>
    "tpu.trace_start"() <{level = 10 : i32, message = "bqd,bkd->bqk"}> : () -> ()
    %cst_31 = arith.constant dense<0.000000e+00> : vector<2x8x8xf32>
    %122 = tpu.matmul %117, %119, %cst_31 {dimension_numbers = #tpu.dot_dimension_numbers<[2], [2], [1], [1], [0, 0, 0, 1, 1, 1], [0], [0]>} : vector<2x8x8xbf16>, vector<2x8x8xbf16>, vector<2x8x8xf32> -> vector<2x8x8xf32>
    "tpu.trace_stop"() : () -> ()
    %cst_32 = arith.constant 0.353553385 : f32
    %123 = vector.broadcast %cst_32 : f32 to vector<2x8x8xf32>
    %124 = arith.mulf %122, %123 : vector<2x8x8xf32>
    %125 = vector.broadcast %1 : vector<2x1x8xf32> to vector<2x8x8xf32>
    %126 = arith.addf %124, %125 : vector<2x8x8xf32>
    %cst_33 = arith.constant dense<0xFF800000> : vector<2x8xf32>
    %127 = vector.multi_reduction <maximumf>, %126, %cst_33 [2] : vector<2x8x8xf32> to vector<2x8xf32>
    %128 = vector.shape_cast %127 : vector<2x8xf32> to vector<2x8x1xf32>
    %129 = vector.broadcast %128 : vector<2x8x1xf32> to vector<2x8x8xf32>
    %130 = arith.subf %126, %129 : vector<2x8x8xf32>
    %131 = math.exp %130 : vector<2x8x8xf32>
    %cst_34 = arith.constant dense<0.000000e+00> : vector<2x8xf32>
    %132 = vector.multi_reduction <add>, %131, %cst_34 [2] : vector<2x8x8xf32> to vector<2x8xf32>
    %133 = vector.shape_cast %132 : vector<2x8xf32> to vector<2x8x1xf32>
    %134 = tpu.reciprocal %133 {approx = true} : vector<2x8x1xf32> -> vector<2x8x1xf32>
    %135 = vector.broadcast %134 : vector<2x8x1xf32> to vector<2x8x8xf32>
    %136 = arith.mulf %131, %135 : vector<2x8x8xf32>
    %137 = arith.truncf %136 : vector<2x8x8xf32> to vector<2x8x8xbf16>
    "tpu.trace_start"() <{level = 10 : i32, message = "bqk,bkd->bqd"}> : () -> ()
    %cst_35 = arith.constant dense<0.000000e+00> : vector<2x8x8xf32>
    %138 = tpu.matmul %137, %121, %cst_35 {dimension_numbers = #tpu.dot_dimension_numbers<[2], [1], [1], [2], [0, 0, 0, 1, 1, 2], [0], [0]>} : vector<2x8x8xbf16>, vector<2x8x8xbf16>, vector<2x8x8xf32> -> vector<2x8x8xf32>
    "tpu.trace_stop"() : () -> ()
    %139 = tpu.concatenate %69, %92, %115, %138 in 2 : vector<2x8x8xf32>, vector<2x8x8xf32>, vector<2x8x8xf32>, vector<2x8x8xf32> -> vector<2x8x32xf32>
    %140 = vector.shape_cast %139 : vector<2x8x32xf32> to vector<16x32xf32>
    %c0_36 = arith.constant 0 : index
    %c0_37 = arith.constant 0 : index
    %141 = vector.load %arg3[%c0_36, %c0_37] : memref<32x64xbf16, #tpu.memory_space<vmem>>, vector<32x64xbf16>
    %142 = arith.truncf %140 : vector<16x32xf32> to vector<16x32xbf16>
    %143 = vector.extract_strided_slice %141 {offsets = [0, 0], sizes = [32, 32], strides = [1, 1]} : vector<32x64xbf16> to vector<32x32xbf16>
    %cst_38 = arith.constant dense<0.000000e+00> : vector<16x32xf32>
    %144 = tpu.matmul %142, %143, %cst_38 {dimension_numbers = #tpu.dot_dimension_numbers<[1], [0], [0], [1], [0, 0, 1, 1], [], []>} : vector<16x32xbf16>, vector<32x32xbf16>, vector<16x32xf32> -> vector<16x32xf32>
    %145 = vector.broadcast %5 : vector<1x32xf32> to vector<16x32xf32>
    %146 = arith.addf %144, %145 : vector<16x32xf32>
    %147 = arith.addf %34, %146 : vector<16x32xf32>
    %cst_39 = arith.constant dense<0.000000e+00> : vector<16xf32>
    %148 = vector.multi_reduction <add>, %147, %cst_39 [1] : vector<16x32xf32> to vector<16xf32>
    %149 = vector.shape_cast %148 : vector<16xf32> to vector<16x1xf32>
    %cst_40 = arith.constant 3.200000e+01 : f32
    %150 = vector.broadcast %cst_40 : f32 to vector<16x1xf32>
    %151 = arith.divf %149, %150 : vector<16x1xf32>
    %152 = vector.broadcast %151 : vector<16x1xf32> to vector<16x32xf32>
    %153 = arith.subf %147, %152 : vector<16x32xf32>
    %154 = arith.mulf %153, %153 : vector<16x32xf32>
    %cst_41 = arith.constant dense<0.000000e+00> : vector<16xf32>
    %155 = vector.multi_reduction <add>, %154, %cst_41 [1] : vector<16x32xf32> to vector<16xf32>
    %156 = vector.shape_cast %155 : vector<16xf32> to vector<16x1xf32>
    %cst_42 = arith.constant 3.200000e+01 : f32
    %157 = vector.broadcast %cst_42 : f32 to vector<16x1xf32>
    %158 = arith.divf %156, %157 : vector<16x1xf32>
    %159 = vector.broadcast %151 : vector<16x1xf32> to vector<16x32xf32>
    %160 = arith.subf %147, %159 : vector<16x32xf32>
    %cst_43 = arith.constant 9.99999996E-13 : f32
    %161 = vector.broadcast %cst_43 : f32 to vector<16x1xf32>
    %162 = arith.addf %158, %161 : vector<16x1xf32>
    %163 = math.rsqrt %162 : vector<16x1xf32>
    %164 = vector.broadcast %163 : vector<16x1xf32> to vector<16x32xf32>
    %165 = arith.mulf %160, %164 : vector<16x32xf32>
    %166 = vector.broadcast %6 : vector<1x32xf32> to vector<16x32xf32>
    %167 = arith.mulf %165, %166 : vector<16x32xf32>
    %168 = vector.broadcast %7 : vector<1x32xf32> to vector<16x32xf32>
    %169 = arith.addf %167, %168 : vector<16x32xf32>
    %170 = arith.truncf %169 : vector<16x32xf32> to vector<16x32xbf16>
    %c0_44 = arith.constant 0 : index
    %c0_45 = arith.constant 0 : index
    %171 = vector.load %arg4[%c0_44, %c0_45] : memref<32x64xbf16, #tpu.memory_space<vmem>>, vector<32x64xbf16>
    %cst_46 = arith.constant dense<0.000000e+00> : vector<16x64xf32>
    %172 = tpu.matmul %170, %171, %cst_46 {dimension_numbers = #tpu.dot_dimension_numbers<[1], [0], [0], [1], [0, 0, 1, 1], [], []>} : vector<16x32xbf16>, vector<32x64xbf16>, vector<16x64xf32> -> vector<16x64xf32>
    %c0_47 = arith.constant 0 : index
    %c0_48 = arith.constant 0 : index
    %173 = vector.load %arg8[%c0_47, %c0_48] : memref<1x64xf32, #tpu.memory_space<vmem>>, vector<1x64xf32>
    %174 = vector.broadcast %173 : vector<1x64xf32> to vector<16x64xf32>
    %175 = arith.addf %172, %174 : vector<16x64xf32>
    %cst_49 = arith.constant 5.000000e-01 : f32
    %176 = vector.broadcast %cst_49 : f32 to vector<16x64xf32>
    %177 = arith.mulf %176, %175 : vector<16x64xf32>
    %cst_50 = arith.constant 4.471500e-02 : f32
    %178 = vector.broadcast %cst_50 : f32 to vector<16x64xf32>
    %179 = arith.mulf %178, %175 : vector<16x64xf32>
    %180 = arith.mulf %179, %175 : vector<16x64xf32>
    %181 = arith.mulf %180, %175 : vector<16x64xf32>
    %182 = arith.addf %175, %181 : vector<16x64xf32>
    %cst_51 = arith.constant 0.797884583 : f32
    %183 = vector.broadcast %cst_51 : f32 to vector<16x64xf32>
    %184 = arith.mulf %183, %182 : vector<16x64xf32>
    %185 = math.tanh %184 : vector<16x64xf32>
    %cst_52 = arith.constant 1.000000e+00 : f32
    %186 = vector.broadcast %cst_52 : f32 to vector<16x64xf32>
    %187 = arith.addf %186, %185 : vector<16x64xf32>
    %188 = arith.mulf %177, %187 : vector<16x64xf32>
    %189 = arith.truncf %188 : vector<16x64xf32> to vector<16x64xbf16>
    %c0_53 = arith.constant 0 : index
    %c0_54 = arith.constant 0 : index
    %190 = vector.load %arg5[%c0_53, %c0_54] : memref<64x32xbf16, #tpu.memory_space<vmem>>, vector<64x32xbf16>
    %cst_55 = arith.constant dense<0.000000e+00> : vector<16x32xf32>
    %191 = tpu.matmul %189, %190, %cst_55 {dimension_numbers = #tpu.dot_dimension_numbers<[1], [0], [0], [1], [0, 0, 1, 1], [], []>} : vector<16x64xbf16>, vector<64x32xbf16>, vector<16x32xf32> -> vector<16x32xf32>
    %192 = vector.broadcast %8 : vector<1x32xf32> to vector<16x32xf32>
    %193 = arith.addf %191, %192 : vector<16x32xf32>
    %194 = arith.addf %169, %193 : vector<16x32xf32>
    %cst_56 = arith.constant dense<0.000000e+00> : vector<16xf32>
    %195 = vector.multi_reduction <add>, %194, %cst_56 [1] : vector<16x32xf32> to vector<16xf32>
    %196 = vector.shape_cast %195 : vector<16xf32> to vector<16x1xf32>
    %cst_57 = arith.constant 3.200000e+01 : f32
    %197 = vector.broadcast %cst_57 : f32 to vector<16x1xf32>
    %198 = arith.divf %196, %197 : vector<16x1xf32>
    %199 = vector.broadcast %198 : vector<16x1xf32> to vector<16x32xf32>
    %200 = arith.subf %194, %199 : vector<16x32xf32>
    %201 = arith.mulf %200, %200 : vector<16x32xf32>
    %cst_58 = arith.constant dense<0.000000e+00> : vector<16xf32>
    %202 = vector.multi_reduction <add>, %201, %cst_58 [1] : vector<16x32xf32> to vector<16xf32>
    %203 = vector.shape_cast %202 : vector<16xf32> to vector<16x1xf32>
    %cst_59 = arith.constant 3.200000e+01 : f32
    %204 = vector.broadcast %cst_59 : f32 to vector<16x1xf32>
    %205 = arith.divf %203, %204 : vector<16x1xf32>
    %206 = vector.broadcast %198 : vector<16x1xf32> to vector<16x32xf32>
    %207 = arith.subf %194, %206 : vector<16x32xf32>
    %cst_60 = arith.constant 9.99999996E-13 : f32
    %208 = vector.broadcast %cst_60 : f32 to vector<16x1xf32>
    %209 = arith.addf %205, %208 : vector<16x1xf32>
    %210 = math.rsqrt %209 : vector<16x1xf32>
    %211 = vector.broadcast %210 : vector<16x1xf32> to vector<16x32xf32>
    %212 = arith.mulf %207, %211 : vector<16x32xf32>
    %213 = vector.broadcast %9 : vector<1x32xf32> to vector<16x32xf32>
    %214 = arith.mulf %212, %213 : vector<16x32xf32>
    %215 = vector.broadcast %10 : vector<1x32xf32> to vector<16x32xf32>
    %216 = arith.addf %214, %215 : vector<16x32xf32>
    %217 = vector.shape_cast %216 : vector<16x32xf32> to vector<2x8x32xf32>
    %218 = vector.extract_strided_slice %217 {offsets = [0, 0, 0], sizes = [2, 1, 32], strides = [1, 1, 1]} : vector<2x8x32xf32> to vector<2x1x32xf32>
    %219 = vector.shape_cast %218 : vector<2x1x32xf32> to vector<2x32xf32>
    %220 = arith.truncf %219 : vector<2x32xf32> to vector<2x32xbf16>
    %221 = vector.extract_strided_slice %141 {offsets = [0, 32], sizes = [32, 32], strides = [1, 1]} : vector<32x64xbf16> to vector<32x32xbf16>
    %cst_61 = arith.constant dense<0.000000e+00> : vector<2x32xf32>
    %222 = tpu.matmul %220, %221, %cst_61 {dimension_numbers = #tpu.dot_dimension_numbers<[1], [0], [0], [1], [0, 0, 1, 1], [], []>} : vector<2x32xbf16>, vector<32x32xbf16>, vector<2x32xf32> -> vector<2x32xf32>
    %223 = vector.broadcast %11 : vector<1x32xf32> to vector<2x32xf32>
    %224 = arith.addf %222, %223 : vector<2x32xf32>
    %225 = math.tanh %224 : vector<2x32xf32>
    %226 = arith.truncf %225 : vector<2x32xf32> to vector<2x32xbf16>
    %c0_62 = arith.constant 0 : index
    %c0_63 = arith.constant 0 : index
    %227 = vector.load %arg6[%c0_62, %c0_63] : memref<32x128xbf16, #tpu.memory_space<vmem>>, vector<32x128xbf16>
    %cst_64 = arith.constant dense<0.000000e+00> : vector<2x128xf32>
    %228 = tpu.matmul %226, %227, %cst_64 {dimension_numbers = #tpu.dot_dimension_numbers<[1], [0], [0], [1], [0, 0, 1, 1], [], []>} : vector<2x32xbf16>, vector<32x128xbf16>, vector<2x128xf32> -> vector<2x128xf32>
    %c0_65 = arith.constant 0 : index
    %c0_66 = arith.constant 0 : index
    %229 = vector.load %arg9[%c0_65, %c0_66] : memref<1x128xf32, #tpu.memory_space<vmem>>, vector<1x128xf32>
    %230 = vector.broadcast %229 : vector<1x128xf32> to vector<2x128xf32>
    %231 = arith.addf %228, %230 : vector<2x128xf32>
    %c0_67 = arith.constant 0 : index
    %c0_68 = arith.constant 0 : index
    %232 = vector.load %arg11[%c0_67, %c0_68] : memref<2x128xf32, #tpu.memory_space<vmem>>, vector<2x128xf32>
    tpu.vector_store %arg11[%c0_67, %c0_68], %231 {strides = array<i32>} : memref<2x128xf32, #tpu.memory_space<vmem>>, vector<2x128xf32>,
    return
  }
}

</mosaic_0001>

<llo_original>
// kernel: bert_class_forward.1
$region0: #{bert_class_forward.1}
  #allocation0 [shape = 'u32[]', space=smem, size = 0x4, offset = 0x4, fixed_abs, tag = 'smem constant byte address 0x4 - core index']
  #allocation1 [shape = 'u32[72,128]{1,0:T(1,128)}', space=vmem, size = 0x9000, scoped, tag = 'internal scratch']
  %s0 = inlined_call_operand.vmem [shape: f32[2,8,32], index: 0, kind: input, shape index: {}]
  %s1 = inlined_call_operand.vmem [shape: f32[2,1,8], index: 1, kind: input, shape index: {}]
  %s2 = inlined_call_operand.vmem [shape: bf16[32,96], index: 2, kind: input, shape index: {}]
  %s3 = inlined_call_operand.vmem [shape: bf16[32,64], index: 3, kind: input, shape index: {}]
  %s4 = inlined_call_operand.vmem [shape: bf16[32,64], index: 4, kind: input, shape index: {}]
  %s5 = inlined_call_operand.vmem [shape: bf16[64,32], index: 5, kind: input, shape index: {}]
  %s6 = inlined_call_operand.vmem [shape: bf16[32,128], index: 6, kind: input, shape index: {}]
  %s7 = inlined_call_operand.vmem [shape: f32[1,96], index: 7, kind: input, shape index: {}]
  %s8 = inlined_call_operand.vmem [shape: f32[1,64], index: 8, kind: input, shape index: {}]
  %s9 = inlined_call_operand.vmem [shape: f32[1,128], index: 9, kind: input, shape index: {}]
  %s10 = inlined_call_operand.vmem [shape: f32[16,32], index: 10, kind: input, shape index: {}]
  %s11 = inlined_call_operand.hbm [shape: f32[2,128], index: 11, kind: output, shape index: {}]
  %s12 = sld [smem:[#allocation0]]
  $region54: #{bert_class_forward.1} parent=0
    _
  %s14 = ssub.s32 1, %s12
  %s15 = scalar_select 0, %s14, %s12
  $region1: #{bert_class_forward.1} parent=0
    #allocation2 [shape = 'u8[1024]{0}', space=vmem, size = 0x400, scoped, tag = 'output window, operand 0, single buffered']
    #allocation3 [shape = 's32[1]{0}', space=sflag, size = 0x4, scoped, tag = 'scoped memory for bert_class_forward.1']
    %16 = vsyncpa [#allocation3], 0
    // Predicated region
    $region2: #{bert_class_forward.1} parent=1 // pred_check
      _
    $region3: #{bert_class_forward.1} parent=1 // pred_check_branch
      %18 = sbr.rel (0) target = $region5
    $region4: #{bert_class_forward.1} parent=1 // pred_region
      _
    $region5: #{bert_class_forward.1} parent=1 // pred_fallthru
      _
    // Predicated region
    $region6: #{bert_class_forward.1} parent=1 // pred_check
      _
    $region7: #{bert_class_forward.1} parent=1 // pred_check_branch
      %20 = sbr.rel (0) target = $region9
    $region8: #{bert_class_forward.1} parent=1 // pred_region
      _
    $region9: #{bert_class_forward.1} parent=1 // pred_fallthru
      _
    // Predicated region
    $region10: #{bert_class_forward.1} parent=1 // pred_check
      _
    $region11: #{bert_class_forward.1} parent=1 // pred_check_branch
      %22 = sbr.rel (0) target = $region13
    $region12: #{bert_class_forward.1} parent=1 // pred_region
      _
    $region13: #{bert_class_forward.1} parent=1 // pred_fallthru
      _
    // Predicated region
    $region14: #{bert_class_forward.1} parent=1 // pred_check
      _
    $region15: #{bert_class_forward.1} parent=1 // pred_check_branch
      %24 = sbr.rel (0) target = $region17
    $region16: #{bert_class_forward.1} parent=1 // pred_region
      _
    $region17: #{bert_class_forward.1} parent=1 // pred_fallthru
      _
    // Predicated region
    $region18: #{bert_class_forward.1} parent=1 // pred_check
      _
    $region19: #{bert_class_forward.1} parent=1 // pred_check_branch
      %26 = sbr.rel (0) target = $region21
    $region20: #{bert_class_forward.1} parent=1 // pred_region
      _
    $region21: #{bert_class_forward.1} parent=1 // pred_fallthru
      _
    // Predicated region
    $region22: #{bert_class_forward.1} parent=1 // pred_check
      _
    $region23: #{bert_class_forward.1} parent=1 // pred_check_branch
      %28 = sbr.rel (0) target = $region25
    $region24: #{bert_class_forward.1} parent=1 // pred_region
      _
    $region25: #{bert_class_forward.1} parent=1 // pred_fallthru
      _
    // Predicated region
    $region26: #{bert_class_forward.1} parent=1 // pred_check
      _
    $region27: #{bert_class_forward.1} parent=1 // pred_check_branch
      %30 = sbr.rel (0) target = $region29
    $region28: #{bert_class_forward.1} parent=1 // pred_region
      _
    $region29: #{bert_class_forward.1} parent=1 // pred_fallthru
      _
    // Predicated region
    $region30: #{bert_class_forward.1} parent=1 // pred_check
      _
    $region31: #{bert_class_forward.1} parent=1 // pred_check_branch
      %32 = sbr.rel (0) target = $region33
    $region32: #{bert_class_forward.1} parent=1 // pred_region
      _
    $region33: #{bert_class_forward.1} parent=1 // pred_fallthru
      _
    // Predicated region
    $region34: #{bert_class_forward.1} parent=1 // pred_check
      _
    $region35: #{bert_class_forward.1} parent=1 // pred_check_branch
      %34 = sbr.rel (0) target = $region37
    $region36: #{bert_class_forward.1} parent=1 // pred_region
      _
    $region37: #{bert_class_forward.1} parent=1 // pred_fallthru
      _
    // Predicated region
    $region38: #{bert_class_forward.1} parent=1 // pred_check
      _
    $region39: #{bert_class_forward.1} parent=1 // pred_check_branch
      %36 = sbr.rel (0) target = $region41
    $region40: #{bert_class_forward.1} parent=1 // pred_region
      _
    $region41: #{bert_class_forward.1} parent=1 // pred_fallthru
      _
    // Predicated region
    $region42: #{bert_class_forward.1} parent=1 // pred_check
      _
    $region43: #{bert_class_forward.1} parent=1 // pred_check_branch
      %38 = sbr.rel (0) target = $region45
    $region44: #{bert_class_forward.1} parent=1 // pred_region
      _
    $region45: #{bert_class_forward.1} parent=1 // pred_fallthru
      _
    %v40 = vld [vmem:[%s0] sm:$0xff]
    %v41 = vld [vmem:[%s0 + $0x8] sm:$0xff]
    %v42 = vld [vmem:[%s1] sm:$0x1]
    %v43 = vld [vmem:[%s1 + $0x1] sm:$0x1]
    %v44 = vld [vmem:[%s10] sm:$0xff]
    %v45 = vld [vmem:[%s10 + $0x8] sm:$0xff]
    %vm46 = vcmask 261120
    %v47 = vsel %vm46, %v40, 0.0
    %48 = vadd.xlane.f32.xlu0 %v47
    %v49 = vpop.xlane.xlu0 %48
    %v50 = vsel %vm46, %v41, 0.0
    %51 = vadd.xlane.f32.xlu0 %v50
    %v52 = vpop.xlane.xlu0 %51
    %v53 = vrcp.pop 32.0
    %v54 = vmul.f32 32.0, %v53
    %v55 = vsub.f32 1.0, %v54
    %v56 = vmul.f32 %v53, %v55
    %v57 = vadd.f32 %v53, %v56
    %vm58 = vweird.f32 %v53
    %v59 = vsel %vm58, %v53, %v57
    %v60 = vmul.f32 %v49, %v59
    %v61 = vmul.f32 %v52, %v59
    %v62 = vsub.f32 %v40, %v60
    %v63 = vsub.f32 %v41, %v61
    %v64 = vmul.f32 %v62, %v62
    %v65 = vmul.f32 %v63, %v63
    %v66 = vsel %vm46, %v64, 0.0
    %67 = vadd.xlane.f32.xlu0 %v66
    %v68 = vpop.xlane.xlu0 %67
    %v69 = vsel %vm46, %v65, 0.0
    %70 = vadd.xlane.f32.xlu0 %v69
    %v71 = vpop.xlane.xlu0 %70
    %v72 = vmul.f32 %v68, %v59
    %v73 = vmul.f32 %v71, %v59
    %v74 = vadd.f32 %v72, 1e-12
    %v75 = vadd.f32 %v73, 1e-12
    %v76 = vrsqrt.pop %v74
    %v77 = vmul.f32 %v76, %v74
    %v78 = vmul.f32 %v77, %v76
    %v79 = vmul.f32 0.5, %v78
    %v80 = vsub.f32 1.5, %v79
    %v81 = vmul.f32 %v76, %v80
    %vm82 = vweird.f32 %v74
    %vm83 = vweird.f32 %v76
    %vm84 = vmor %vm82, %vm83
    %v85 = vsel %vm84, %v76, %v81
    %v86 = vrsqrt.pop %v75
    %v87 = vmul.f32 %v86, %v75
    %v88 = vmul.f32 %v87, %v86
    %v89 = vmul.f32 0.5, %v88
    %v90 = vsub.f32 1.5, %v89
    %v91 = vmul.f32 %v86, %v90
    %vm92 = vweird.f32 %v75
    %vm93 = vweird.f32 %v86
    %vm94 = vmor %vm92, %vm93
    %v95 = vsel %vm94, %v86, %v91
    %v96 = vmul.f32 %v62, %v85
    %v97 = vmul.f32 %v63, %v95
    %v98 = vperm.slane %v44, 0
    %v99 = vmul.f32 %v96, %v98
    %v100 = vmul.f32 %v97, %v98
    %v101 = vperm.slane %v44, 1
    %v102 = vadd.f32 %v99, %v101
    %v103 = vadd.f32 %v100, %v101
    %v104 = vpack.c.bf16 %v103, %v102
    %v105 = vld [vmem:[%s2] sm:$0xf]
    %v106 = vld [vmem:[%s2 + $0x4] sm:$0xf]
    %v107 = vld [vmem:[%s2 + $0x8] sm:$0xf]
    %v108 = vld [vmem:[%s2 + $0xc] sm:$0xf]
    %v109 = vld [vmem:[%s7] sm:$0x1]
    %v111 = vperm.slane %v109, 0
    %v117 = vunpack.c.l.b16 %v105
    %v118 = vunpack.c.l.b16 %v106
    %v119 = vunpack.c.l.b16 %v107
    %v120 = vunpack.c.l.b16 %v108
    %v121 = vpack.c.b16 %v118, %v117
    %v122 = vpack.c.b16 %v120, %v119
    %v126 = vsel %vm46, %v104, 0
    %128 = vmatpush.bf16.msra.mxu0 0
    %129 = vmatpush.bf16.msra.mxu0 0
    %130 = vmatpush.bf16.msra.mxu0 0
    %131 = vmatpush.bf16.msra.mxu0 0
    %132 = vmatpush.bf16.msra.mxu0 0
    %133 = vmatpush.bf16.msra.mxu0 0
    %134 = vmatpush.bf16.msra.mxu0 %v122
    %135 = vmatpush.bf16.msra.mxu0 %v121
    %136 = vmatmul.bf16.gmra.mxu0 %v126
    %v137 = vpop.f32.mrf.mxu0
    %v138 = vadd.f32 %v111, %v137
    %v139 = vpop.f32.mrf.mxu0
    %v140 = vadd.f32 %v111, %v139
    %141 = vdwg.mxu0
    %v142 = vpack.c.bf16 %v138, %v138
    %v143 = vpack.c.bf16 %v140, %v140
    %v145 = vunpack.c.l.b16 %v142
    %v146 = vpack.c.b16 %v145, %v145
    %147 = vrot.lane.b32.xlu0 %v146, 96
    %v148 = vpop.permute.xlu0 %147
    %vm149 = vcmask 64512
    %v151 = vsel %vm149, %v142, 0
    %v154 = vsel %vm149, %v148, 0
    %156 = vmatpush.bf16.xpose.msra.mxu0 0
    %157 = vmatpush.bf16.xpose.msra.mxu0 0
    %158 = vmatpush.bf16.xpose.msra.mxu0 0
    %159 = vmatpush.bf16.xpose.msra.mxu0 0
    %160 = vmatpush.bf16.xpose.msra.mxu0 0
    %161 = vmatpush.bf16.xpose.msra.mxu0 0
    %162 = vmatpush.bf16.xpose.msra.mxu0 0
    %163 = vmatpush.bf16.xpose.msra.mxu0 %v154
    %164 = vmatmul.bf16.gmra.mxu0 %v151
    %v165 = vpop.f32.mrf.mxu0
    %v166 = vadd.f32 0.0, %v165
    %v167 = vpop.f32.mrf.mxu0
    %168 = vdwg.mxu0
    %v170 = vunpack.c.l.b16 %v143
    %v171 = vpack.c.b16 %v170, %v170
    %172 = vrot.lane.b32.xlu0 %v171, 96
    %v173 = vpop.permute.xlu0 %172
    %v175 = vsel %vm149, %v143, 0
    %v178 = vsel %vm149, %v173, 0
    %180 = vmatpush.bf16.xpose.msra.mxu0 0
    %181 = vmatpush.bf16.xpose.msra.mxu0 0
    %182 = vmatpush.bf16.xpose.msra.mxu0 0
    %183 = vmatpush.bf16.xpose.msra.mxu0 0
    %184 = vmatpush.bf16.xpose.msra.mxu0 0
    %185 = vmatpush.bf16.xpose.msra.mxu0 0
    %186 = vmatpush.bf16.xpose.msra.mxu0 0
    %187 = vmatpush.bf16.xpose.msra.mxu0 %v178
    %188 = vmatmul.bf16.gmra.mxu0 %v175
    %v189 = vpop.f32.mrf.mxu0
    %v190 = vadd.f32 0.0, %v189
    %v191 = vpop.f32.mrf.mxu0
    %192 = vdwg.mxu0
    %v193 = vmul.f32 %v166, 0.35355338
    %v194 = vmul.f32 %v190, 0.35355338
    %v197 = vperm.slane %v42, 0
    %v198 = vperm.slane %v43, 0
    %v201 = vadd.f32 %v193, %v197
    %v202 = vadd.f32 %v194, %v198
    %v203 = vsel %vm149, %v201, -inf
    %204 = vmax.xlane.f32.xlu0 %v203
    %v205 = vpop.xlane.xlu0 %204
    %v206 = vsel %vm149, %v202, -inf
    %207 = vmax.xlane.f32.xlu0 %v206
    %v208 = vpop.xlane.xlu0 %207
    %v209 = vsub.f32 %v201, %v205
    %v210 = vsub.f32 %v202, %v208
    %v211 = vmul.f32 %v209, 1.442695
    %v212 = vpow.pop %v211
    %v213 = vmul.f32 %v210, 1.442695
    %v214 = vpow.pop %v213
    %v215 = vsel %vm149, %v212, 0.0
    %216 = vadd.xlane.f32.xlu0 %v215
    %v217 = vpop.xlane.xlu0 %216
    %v218 = vsel %vm149, %v214, 0.0
    %219 = vadd.xlane.f32.xlu0 %v218
    %v220 = vpop.xlane.xlu0 %219
    %v221 = vrcp.pop %v217
    %v222 = vrcp.pop %v220
    %v223 = vmul.f32 %v212, %v221
    %v224 = vmul.f32 %v214, %v222
    %v225 = vpack.c.bf16 %v223, %v223
    %v226 = vpack.c.bf16 %v224, %v224
    %227 = vrot.lane.b32.xlu0 %v146, 64
    %v228 = vpop.permute.xlu0 %227
    %v230 = vsel %vm149, %v225, 0
    %vm232 = vcmask 1043456
    %v234 = vsel %vm232, %v228, 0
    %236 = vmatpush.bf16.msra.mxu0 0
    %237 = vmatpush.bf16.msra.mxu0 0
    %238 = vmatpush.bf16.msra.mxu0 0
    %239 = vmatpush.bf16.msra.mxu0 0
    %240 = vmatpush.bf16.msra.mxu0 0
    %241 = vmatpush.bf16.msra.mxu0 0
    %242 = vmatpush.bf16.msra.mxu0 0
    %243 = vmatpush.bf16.msra.mxu0 %v234
    %244 = vmatmul.bf16.gmra.mxu0 %v230
    %v245 = vpop.f32.mrf.mxu0
    %v246 = vadd.f32 0.0, %v245
    %v247 = vpop.f32.mrf.mxu0
    %248 = vdwg.mxu0
    %249 = vrot.lane.b32.xlu0 %v171, 64
    %v250 = vpop.permute.xlu0 %249
    %v252 = vsel %vm149, %v226, 0
    %v255 = vsel %vm232, %v250, 0
    %257 = vmatpush.bf16.msra.mxu0 0
    %258 = vmatpush.bf16.msra.mxu0 0
    %259 = vmatpush.bf16.msra.mxu0 0
    %260 = vmatpush.bf16.msra.mxu0 0
    %261 = vmatpush.bf16.msra.mxu0 0
    %262 = vmatpush.bf16.msra.mxu0 0
    %263 = vmatpush.bf16.msra.mxu0 0
    %264 = vmatpush.bf16.msra.mxu0 %v255
    %265 = vmatmul.bf16.gmra.mxu0 %v252
    %v266 = vpop.f32.mrf.mxu0
    %v267 = vadd.f32 0.0, %v266
    %v268 = vpop.f32.mrf.mxu0
    %269 = vdwg.mxu0
    %270 = vrot.lane.b32.xlu0 %v146, 120
    %v271 = vpop.permute.xlu0 %270
    %272 = vrot.lane.b32.xlu0 %v146, 88
    %v273 = vpop.permute.xlu0 %272
    %v275 = vsel %vm149, %v271, 0
    %v278 = vsel %vm149, %v273, 0
    %280 = vmatpush.bf16.xpose.msra.mxu0 0
    %281 = vmatpush.bf16.xpose.msra.mxu0 0
    %282 = vmatpush.bf16.xpose.msra.mxu0 0
    %283 = vmatpush.bf16.xpose.msra.mxu0 0
    %284 = vmatpush.bf16.xpose.msra.mxu0 0
    %285 = vmatpush.bf16.xpose.msra.mxu0 0
    %286 = vmatpush.bf16.xpose.msra.mxu0 0
    %287 = vmatpush.bf16.xpose.msra.mxu0 %v278
    %288 = vmatmul.bf16.gmra.mxu0 %v275
    %v289 = vpop.f32.mrf.mxu0
    %v290 = vadd.f32 0.0, %v289
    %v291 = vpop.f32.mrf.mxu0
    %292 = vdwg.mxu0
    %293 = vrot.lane.b32.xlu0 %v171, 120
    %v294 = vpop.permute.xlu0 %293
    %295 = vrot.lane.b32.xlu0 %v171, 88
    %v296 = vpop.permute.xlu0 %295
    %v298 = vsel %vm149, %v294, 0
    %v301 = vsel %vm149, %v296, 0
    %303 = vmatpush.bf16.xpose.msra.mxu0 0
    %304 = vmatpush.bf16.xpose.msra.mxu0 0
    %305 = vmatpush.bf16.xpose.msra.mxu0 0
    %306 = vmatpush.bf16.xpose.msra.mxu0 0
    %307 = vmatpush.bf16.xpose.msra.mxu0 0
    %308 = vmatpush.bf16.xpose.msra.mxu0 0
    %309 = vmatpush.bf16.xpose.msra.mxu0 0
    %310 = vmatpush.bf16.xpose.msra.mxu0 %v301
    %311 = vmatmul.bf16.gmra.mxu0 %v298
    %v312 = vpop.f32.mrf.mxu0
    %v313 = vadd.f32 0.0, %v312
    %v314 = vpop.f32.mrf.mxu0
    %315 = vdwg.mxu0
    %v316 = vmul.f32 %v290, 0.35355338
    %v317 = vmul.f32 %v313, 0.35355338
    %v318 = vadd.f32 %v316, %v197
    %v319 = vadd.f32 %v317, %v198
    %v320 = vsel %vm149, %v318, -inf
    %321 = vmax.xlane.f32.xlu0 %v320
    %v322 = vpop.xlane.xlu0 %321
    %v323 = vsel %vm149, %v319, -inf
    %324 = vmax.xlane.f32.xlu0 %v323
    %v325 = vpop.xlane.xlu0 %324
    %v326 = vsub.f32 %v318, %v322
    %v327 = vsub.f32 %v319, %v325
    %v328 = vmul.f32 %v326, 1.442695
    %v329 = vpow.pop %v328
    %v330 = vmul.f32 %v327, 1.442695
    %v331 = vpow.pop %v330
    %v332 = vsel %vm149, %v329, 0.0
    %333 = vadd.xlane.f32.xlu0 %v332
    %v334 = vpop.xlane.xlu0 %333
    %v335 = vsel %vm149, %v331, 0.0
    %336 = vadd.xlane.f32.xlu0 %v335
    %v337 = vpop.xlane.xlu0 %336
    %v338 = vrcp.pop %v334
    %v339 = vrcp.pop %v337
    %v340 = vmul.f32 %v329, %v338
    %v341 = vmul.f32 %v331, %v339
    %v342 = vpack.c.bf16 %v340, %v340
    %v343 = vpack.c.bf16 %v341, %v341
    %344 = vrot.lane.b32.xlu0 %v146, 56
    %v345 = vpop.permute.xlu0 %344
    %v347 = vsel %vm149, %v342, 0
    %v350 = vsel %vm232, %v345, 0
    %352 = vmatpush.bf16.msra.mxu0 0
    %353 = vmatpush.bf16.msra.mxu0 0
    %354 = vmatpush.bf16.msra.mxu0 0
    %355 = vmatpush.bf16.msra.mxu0 0
    %356 = vmatpush.bf16.msra.mxu0 0
    %357 = vmatpush.bf16.msra.mxu0 0
    %358 = vmatpush.bf16.msra.mxu0 0
    %359 = vmatpush.bf16.msra.mxu0 %v350
    %360 = vmatmul.bf16.gmra.mxu0 %v347
    %v361 = vpop.f32.mrf.mxu0
    %v362 = vadd.f32 0.0, %v361
    %v363 = vpop.f32.mrf.mxu0
    %364 = vdwg.mxu0
    %365 = vrot.lane.b32.xlu0 %v171, 56
    %v366 = vpop.permute.xlu0 %365
    %v368 = vsel %vm149, %v343, 0
    %v371 = vsel %vm232, %v366, 0
    %373 = vmatpush.bf16.msra.mxu0 0
    %374 = vmatpush.bf16.msra.mxu0 0
    %375 = vmatpush.bf16.msra.mxu0 0
    %376 = vmatpush.bf16.msra.mxu0 0
    %377 = vmatpush.bf16.msra.mxu0 0
    %378 = vmatpush.bf16.msra.mxu0 0
    %379 = vmatpush.bf16.msra.mxu0 0
    %380 = vmatpush.bf16.msra.mxu0 %v371
    %381 = vmatmul.bf16.gmra.mxu0 %v368
    %v382 = vpop.f32.mrf.mxu0
    %v383 = vadd.f32 0.0, %v382
    %v384 = vpop.f32.mrf.mxu0
    %385 = vdwg.mxu0
    %386 = vrot.lane.b32.xlu0 %v146, 112
    %v387 = vpop.permute.xlu0 %386
    %388 = vrot.lane.b32.xlu0 %v146, 80
    %v389 = vpop.permute.xlu0 %388
    %v391 = vsel %vm149, %v387, 0
    %v394 = vsel %vm149, %v389, 0
    %396 = vmatpush.bf16.xpose.msra.mxu0 0
    %397 = vmatpush.bf16.xpose.msra.mxu0 0
    %398 = vmatpush.bf16.xpose.msra.mxu0 0
    %399 = vmatpush.bf16.xpose.msra.mxu0 0
    %400 = vmatpush.bf16.xpose.msra.mxu0 0
    %401 = vmatpush.bf16.xpose.msra.mxu0 0
    %402 = vmatpush.bf16.xpose.msra.mxu0 0
    %403 = vmatpush.bf16.xpose.msra.mxu0 %v394
    %404 = vmatmul.bf16.gmra.mxu0 %v391
    %v405 = vpop.f32.mrf.mxu0
    %v406 = vadd.f32 0.0, %v405
    %v407 = vpop.f32.mrf.mxu0
    %408 = vdwg.mxu0
    %409 = vrot.lane.b32.xlu0 %v171, 112
    %v410 = vpop.permute.xlu0 %409
    %411 = vrot.lane.b32.xlu0 %v171, 80
    %v412 = vpop.permute.xlu0 %411
    %v414 = vsel %vm149, %v410, 0
    %v417 = vsel %vm149, %v412, 0
    %419 = vmatpush.bf16.xpose.msra.mxu0 0
    %420 = vmatpush.bf16.xpose.msra.mxu0 0
    %421 = vmatpush.bf16.xpose.msra.mxu0 0
    %422 = vmatpush.bf16.xpose.msra.mxu0 0
    %423 = vmatpush.bf16.xpose.msra.mxu0 0
    %424 = vmatpush.bf16.xpose.msra.mxu0 0
    %425 = vmatpush.bf16.xpose.msra.mxu0 0
    %426 = vmatpush.bf16.xpose.msra.mxu0 %v417
    %427 = vmatmul.bf16.gmra.mxu0 %v414
    %v428 = vpop.f32.mrf.mxu0
    %v429 = vadd.f32 0.0, %v428
    %v430 = vpop.f32.mrf.mxu0
    %431 = vdwg.mxu0
    %v432 = vmul.f32 %v406, 0.35355338
    %v433 = vmul.f32 %v429, 0.35355338
    %v434 = vadd.f32 %v432, %v197
    %v435 = vadd.f32 %v433, %v198
    %v436 = vsel %vm149, %v434, -inf
    %437 = vmax.xlane.f32.xlu0 %v436
    %v438 = vpop.xlane.xlu0 %437
    %v439 = vsel %vm149, %v435, -inf
    %440 = vmax.xlane.f32.xlu0 %v439
    %v441 = vpop.xlane.xlu0 %440
    %v442 = vsub.f32 %v434, %v438
    %v443 = vsub.f32 %v435, %v441
    %v444 = vmul.f32 %v442, 1.442695
    %v445 = vpow.pop %v444
    %v446 = vmul.f32 %v443, 1.442695
    %v447 = vpow.pop %v446
    %v448 = vsel %vm149, %v445, 0.0
    %449 = vadd.xlane.f32.xlu0 %v448
    %v450 = vpop.xlane.xlu0 %449
    %v451 = vsel %vm149, %v447, 0.0
    %452 = vadd.xlane.f32.xlu0 %v451
    %v453 = vpop.xlane.xlu0 %452
    %v454 = vrcp.pop %v450
    %v455 = vrcp.pop %v453
    %v456 = vmul.f32 %v445, %v454
    %v457 = vmul.f32 %v447, %v455
    %v458 = vpack.c.bf16 %v456, %v456
    %v459 = vpack.c.bf16 %v457, %v457
    %460 = vrot.lane.b32.xlu0 %v146, 48
    %v461 = vpop.permute.xlu0 %460
    %v463 = vsel %vm149, %v458, 0
    %v466 = vsel %vm232, %v461, 0
    %468 = vmatpush.bf16.msra.mxu0 0
    %469 = vmatpush.bf16.msra.mxu0 0
    %470 = vmatpush.bf16.msra.mxu0 0
    %471 = vmatpush.bf16.msra.mxu0 0
    %472 = vmatpush.bf16.msra.mxu0 0
    %473 = vmatpush.bf16.msra.mxu0 0
    %474 = vmatpush.bf16.msra.mxu0 0
    %475 = vmatpush.bf16.msra.mxu0 %v466
    %476 = vmatmul.bf16.gmra.mxu0 %v463
    %v477 = vpop.f32.mrf.mxu0
    %v478 = vadd.f32 0.0, %v477
    %v479 = vpop.f32.mrf.mxu0
    %480 = vdwg.mxu0
    %481 = vrot.lane.b32.xlu0 %v171, 48
    %v482 = vpop.permute.xlu0 %481
    %v484 = vsel %vm149, %v459, 0
    %v487 = vsel %vm232, %v482, 0
    %489 = vmatpush.bf16.msra.mxu0 0
    %490 = vmatpush.bf16.msra.mxu0 0
    %491 = vmatpush.bf16.msra.mxu0 0
    %492 = vmatpush.bf16.msra.mxu0 0
    %493 = vmatpush.bf16.msra.mxu0 0
    %494 = vmatpush.bf16.msra.mxu0 0
    %495 = vmatpush.bf16.msra.mxu0 0
    %496 = vmatpush.bf16.msra.mxu0 %v487
    %497 = vmatmul.bf16.gmra.mxu0 %v484
    %v498 = vpop.f32.mrf.mxu0
    %v499 = vadd.f32 0.0, %v498
    %v500 = vpop.f32.mrf.mxu0
    %501 = vdwg.mxu0
    %502 = vrot.lane.b32.xlu0 %v146, 104
    %v503 = vpop.permute.xlu0 %502
    %504 = vrot.lane.b32.xlu0 %v146, 72
    %v505 = vpop.permute.xlu0 %504
    %v507 = vsel %vm149, %v503, 0
    %v510 = vsel %vm149, %v505, 0
    %512 = vmatpush.bf16.xpose.msra.mxu0 0
    %513 = vmatpush.bf16.xpose.msra.mxu0 0
    %514 = vmatpush.bf16.xpose.msra.mxu0 0
    %515 = vmatpush.bf16.xpose.msra.mxu0 0
    %516 = vmatpush.bf16.xpose.msra.mxu0 0
    %517 = vmatpush.bf16.xpose.msra.mxu0 0
    %518 = vmatpush.bf16.xpose.msra.mxu0 0
    %519 = vmatpush.bf16.xpose.msra.mxu0 %v510
    %520 = vmatmul.bf16.gmra.mxu0 %v507
    %v521 = vpop.f32.mrf.mxu0
    %v522 = vadd.f32 0.0, %v521
    %v523 = vpop.f32.mrf.mxu0
    %524 = vdwg.mxu0
    %525 = vrot.lane.b32.xlu0 %v171, 104
    %v526 = vpop.permute.xlu0 %525
    %527 = vrot.lane.b32.xlu0 %v171, 72
    %v528 = vpop.permute.xlu0 %527
    %v530 = vsel %vm149, %v526, 0
    %v533 = vsel %vm149, %v528, 0
    %535 = vmatpush.bf16.xpose.msra.mxu0 0
    %536 = vmatpush.bf16.xpose.msra.mxu0 0
    %537 = vmatpush.bf16.xpose.msra.mxu0 0
    %538 = vmatpush.bf16.xpose.msra.mxu0 0
    %539 = vmatpush.bf16.xpose.msra.mxu0 0
    %540 = vmatpush.bf16.xpose.msra.mxu0 0
    %541 = vmatpush.bf16.xpose.msra.mxu0 0
    %542 = vmatpush.bf16.xpose.msra.mxu0 %v533
    %543 = vmatmul.bf16.gmra.mxu0 %v530
    %v544 = vpop.f32.mrf.mxu0
    %v545 = vadd.f32 0.0, %v544
    %v546 = vpop.f32.mrf.mxu0
    %547 = vdwg.mxu0
    %v548 = vmul.f32 %v522, 0.35355338
    %v549 = vmul.f32 %v545, 0.35355338
    %v550 = vadd.f32 %v548, %v197
    %v551 = vadd.f32 %v549, %v198
    %v552 = vsel %vm149, %v550, -inf
    %553 = vmax.xlane.f32.xlu0 %v552
    %v554 = vpop.xlane.xlu0 %553
    %v555 = vsel %vm149, %v551, -inf
    %556 = vmax.xlane.f32.xlu0 %v555
    %v557 = vpop.xlane.xlu0 %556
    %v558 = vsub.f32 %v550, %v554
    %v559 = vsub.f32 %v551, %v557
    %v560 = vmul.f32 %v558, 1.442695
    %v561 = vpow.pop %v560
    %v562 = vmul.f32 %v559, 1.442695
    %v563 = vpow.pop %v562
    %v564 = vsel %vm149, %v561, 0.0
    %565 = vadd.xlane.f32.xlu0 %v564
    %v566 = vpop.xlane.xlu0 %565
    %v567 = vsel %vm149, %v563, 0.0
    %568 = vadd.xlane.f32.xlu0 %v567
    %v569 = vpop.xlane.xlu0 %568
    %v570 = vrcp.pop %v566
    %v571 = vrcp.pop %v569
    %v572 = vmul.f32 %v561, %v570
    %v573 = vmul.f32 %v563, %v571
    %v574 = vpack.c.bf16 %v572, %v572
    %v575 = vpack.c.bf16 %v573, %v573
    %576 = vrot.lane.b32.xlu0 %v146, 40
    %v577 = vpop.permute.xlu0 %576
    %v579 = vsel %vm149, %v574, 0
    %v582 = vsel %vm232, %v577, 0
    %584 = vmatpush.bf16.msra.mxu0 0
    %585 = vmatpush.bf16.msra.mxu0 0
    %586 = vmatpush.bf16.msra.mxu0 0
    %587 = vmatpush.bf16.msra.mxu0 0
    %588 = vmatpush.bf16.msra.mxu0 0
    %589 = vmatpush.bf16.msra.mxu0 0
    %590 = vmatpush.bf16.msra.mxu0 0
    %591 = vmatpush.bf16.msra.mxu0 %v582
    %592 = vmatmul.bf16.gmra.mxu0 %v579
    %v593 = vpop.f32.mrf.mxu0
    %v594 = vadd.f32 0.0, %v593
    %v595 = vpop.f32.mrf.mxu0
    %596 = vdwg.mxu0
    %597 = vrot.lane.b32.xlu0 %v171, 40
    %v598 = vpop.permute.xlu0 %597
    %v600 = vsel %vm149, %v575, 0
    %v603 = vsel %vm232, %v598, 0
    %605 = vmatpush.bf16.msra.mxu0 0
    %606 = vmatpush.bf16.msra.mxu0 0
    %607 = vmatpush.bf16.msra.mxu0 0
    %608 = vmatpush.bf16.msra.mxu0 0
    %609 = vmatpush.bf16.msra.mxu0 0
    %610 = vmatpush.bf16.msra.mxu0 0
    %611 = vmatpush.bf16.msra.mxu0 0
    %612 = vmatpush.bf16.msra.mxu0 %v603
    %613 = vmatmul.bf16.gmra.mxu0 %v600
    %v614 = vpop.f32.mrf.mxu0
    %v615 = vadd.f32 0.0, %v614
    %v616 = vpop.f32.mrf.mxu0
    %617 = vdwg.mxu0
    %620 = vrot.lane.b32.xlu0 %v362, 8
    %v621 = vpop.permute.xlu0 %620
    %622 = vrot.lane.b32.xlu0 %v383, 8
    %v623 = vpop.permute.xlu0 %622
    %628 = vrot.lane.b32.xlu0 %v478, 16
    %v629 = vpop.permute.xlu0 %628
    %630 = vrot.lane.b32.xlu0 %v499, 16
    %v631 = vpop.permute.xlu0 %630
    %636 = vrot.lane.b32.xlu0 %v594, 24
    %v637 = vpop.permute.xlu0 %636
    %638 = vrot.lane.b32.xlu0 %v615, 24
    %v639 = vpop.permute.xlu0 %638
    %v642 = vsel %vm149, %v246, %v621
    %v643 = vsel %vm149, %v267, %v623
    %vm644 = vcmask 130048
    %v645 = vsel %vm644, %v642, %v629
    %v646 = vsel %vm644, %v643, %v631
    %vm647 = vcmask 195584
    %v648 = vsel %vm647, %v645, %v637
    %v649 = vsel %vm647, %v646, %v639
    %v650 = vld [vmem:[%s3] sm:$0xf]
    %v651 = vld [vmem:[%s3 + $0x4] sm:$0xf]
    %v652 = vld [vmem:[%s3 + $0x8] sm:$0xf]
    %v653 = vld [vmem:[%s3 + $0xc] sm:$0xf]
    %v654 = vpack.c.bf16 %v649, %v648
    %v655 = vperm.slane %v44, 2
    %v660 = vunpack.c.l.b16 %v650
    %v661 = vunpack.c.l.b16 %v651
    %v662 = vunpack.c.l.b16 %v652
    %v663 = vunpack.c.l.b16 %v653
    %v664 = vpack.c.b16 %v661, %v660
    %v665 = vpack.c.b16 %v663, %v662
    %v669 = vsel %vm46, %v654, 0
    %671 = vmatpush.bf16.msra.mxu0 0
    %672 = vmatpush.bf16.msra.mxu0 0
    %673 = vmatpush.bf16.msra.mxu0 0
    %674 = vmatpush.bf16.msra.mxu0 0
    %675 = vmatpush.bf16.msra.mxu0 0
    %676 = vmatpush.bf16.msra.mxu0 0
    %677 = vmatpush.bf16.msra.mxu0 %v665
    %678 = vmatpush.bf16.msra.mxu0 %v664
    %679 = vmatmul.bf16.gmra.mxu0 %v669
    %v680 = vpop.f32.mrf.mxu0
    %v681 = vadd.f32 %v655, %v680
    %v682 = vpop.f32.mrf.mxu0
    %v683 = vadd.f32 %v655, %v682
    %684 = vdwg.mxu0
    %v685 = vadd.f32 %v102, %v681
    %v686 = vadd.f32 %v103, %v683
    %v687 = vsel %vm46, %v685, 0.0
    %688 = vadd.xlane.f32.xlu0 %v687
    %v689 = vpop.xlane.xlu0 %688
    %v690 = vsel %vm46, %v686, 0.0
    %691 = vadd.xlane.f32.xlu0 %v690
    %v692 = vpop.xlane.xlu0 %691
    %v693 = vmul.f32 %v689, %v59
    %v694 = vmul.f32 %v692, %v59
    %v695 = vsub.f32 %v685, %v693
    %v696 = vsub.f32 %v686, %v694
    %v697 = vmul.f32 %v695, %v695
    %v698 = vmul.f32 %v696, %v696
    %v699 = vsel %vm46, %v697, 0.0
    %700 = vadd.xlane.f32.xlu0 %v699
    %v701 = vpop.xlane.xlu0 %700
    %v702 = vsel %vm46, %v698, 0.0
    %703 = vadd.xlane.f32.xlu0 %v702
    %v704 = vpop.xlane.xlu0 %703
    %v705 = vmul.f32 %v701, %v59
    %v706 = vmul.f32 %v704, %v59
    %v707 = vadd.f32 %v705, 1e-12
    %v708 = vadd.f32 %v706, 1e-12
    %v709 = vrsqrt.pop %v707
    %v710 = vmul.f32 %v709, %v707
    %v711 = vmul.f32 %v710, %v709
    %v712 = vmul.f32 0.5, %v711
    %v713 = vsub.f32 1.5, %v712
    %v714 = vmul.f32 %v709, %v713
    %vm715 = vweird.f32 %v707
    %vm716 = vweird.f32 %v709
    %vm717 = vmor %vm715, %vm716
    %v718 = vsel %vm717, %v709, %v714
    %v719 = vrsqrt.pop %v708
    %v720 = vmul.f32 %v719, %v708
    %v721 = vmul.f32 %v720, %v719
    %v722 = vmul.f32 0.5, %v721
    %v723 = vsub.f32 1.5, %v722
    %v724 = vmul.f32 %v719, %v723
    %vm725 = vweird.f32 %v708
    %vm726 = vweird.f32 %v719
    %vm727 = vmor %vm725, %vm726
    %v728 = vsel %vm727, %v719, %v724
    %v729 = vmul.f32 %v695, %v718
    %v730 = vmul.f32 %v696, %v728
    %v731 = vperm.slane %v44, 3
    %v732 = vmul.f32 %v729, %v731
    %v733 = vmul.f32 %v730, %v731
    %v734 = vperm.slane %v44, 4
    %v735 = vadd.f32 %v732, %v734
    %v736 = vadd.f32 %v733, %v734
    %v737 = vpack.c.bf16 %v736, %v735
    %v738 = vld [vmem:[%s4] sm:$0xf]
    %v739 = vld [vmem:[%s4 + $0x4] sm:$0xf]
    %v740 = vld [vmem:[%s4 + $0x8] sm:$0xf]
    %v741 = vld [vmem:[%s4 + $0xc] sm:$0xf]
    %v742 = vld [vmem:[%s8] sm:$0x1]
    %v744 = vperm.slane %v742, 0
    %v750 = vunpack.c.l.b16 %v738
    %v751 = vunpack.c.l.b16 %v739
    %v752 = vunpack.c.l.b16 %v740
    %v753 = vunpack.c.l.b16 %v741
    %v754 = vpack.c.b16 %v751, %v750
    %v755 = vpack.c.b16 %v753, %v752
    %v759 = vsel %vm46, %v737, 0
    %761 = vmatpush.bf16.msra.mxu0 0
    %762 = vmatpush.bf16.msra.mxu0 0
    %763 = vmatpush.bf16.msra.mxu0 0
    %764 = vmatpush.bf16.msra.mxu0 0
    %765 = vmatpush.bf16.msra.mxu0 0
    %766 = vmatpush.bf16.msra.mxu0 0
    %767 = vmatpush.bf16.msra.mxu0 %v755
    %768 = vmatpush.bf16.msra.mxu0 %v754
    %769 = vmatmul.bf16.gmra.mxu0 %v759
    %v770 = vpop.f32.mrf.mxu0
    %v771 = vadd.f32 %v744, %v770
    %v772 = vpop.f32.mrf.mxu0
    %v773 = vadd.f32 %v744, %v772
    %774 = vdwg.mxu0
    %v775 = vmul.f32 %v771, 0.5
    %v776 = vmul.f32 %v773, 0.5
    %v777 = vmul.f32 %v771, 0.044715
    %v778 = vmul.f32 %v773, 0.044715
    %v779 = vmul.f32 %v777, %v771
    %v780 = vmul.f32 %v778, %v773
    %v781 = vmul.f32 %v779, %v771
    %v782 = vmul.f32 %v780, %v773
    %v783 = vadd.f32 %v771, %v781
    %v784 = vadd.f32 %v773, %v782
    %v785 = vmul.f32 %v783, 0.7978846
    %v786 = vmul.f32 %v784, 0.7978846
    %v787 = vtanh.pop %v785
    %v788 = vtanh.pop %v786
    %v789 = vadd.f32 %v787, 1.0
    %v790 = vadd.f32 %v788, 1.0
    %v791 = vmul.f32 %v775, %v789
    %v792 = vmul.f32 %v776, %v790
    %v793 = vpack.c.bf16 %v792, %v791
    %v794 = vld [vmem:[%s5] sm:$0xf]
    %v795 = vld [vmem:[%s5 + $0x4] sm:$0xf]
    %v796 = vld [vmem:[%s5 + $0x8] sm:$0xf]
    %v797 = vld [vmem:[%s5 + $0xc] sm:$0xf]
    %v798 = vld [vmem:[%s5 + $0x10] sm:$0xf]
    %v799 = vld [vmem:[%s5 + $0x14] sm:$0xf]
    %v800 = vld [vmem:[%s5 + $0x18] sm:$0xf]
    %v801 = vld [vmem:[%s5 + $0x1c] sm:$0xf]
    %v802 = vperm.slane %v44, 5
    %v811 = vunpack.c.l.b16 %v794
    %v812 = vunpack.c.l.b16 %v795
    %v813 = vunpack.c.l.b16 %v796
    %v814 = vunpack.c.l.b16 %v797
    %v815 = vunpack.c.l.b16 %v798
    %v816 = vunpack.c.l.b16 %v799
    %v817 = vunpack.c.l.b16 %v800
    %v818 = vunpack.c.l.b16 %v801
    %v819 = vpack.c.b16 %v812, %v811
    %v820 = vpack.c.b16 %v814, %v813
    %v821 = vpack.c.b16 %v816, %v815
    %v822 = vpack.c.b16 %v818, %v817
    %vm827 = vcmask 523264
    %v829 = vsel %vm827, %v793, 0
    %831 = vmatpush.bf16.msra.mxu0 0
    %832 = vmatpush.bf16.msra.mxu0 0
    %833 = vmatpush.bf16.msra.mxu0 0
    %834 = vmatpush.bf16.msra.mxu0 0
    %835 = vmatpush.bf16.msra.mxu0 %v822
    %836 = vmatpush.bf16.msra.mxu0 %v821
    %837 = vmatpush.bf16.msra.mxu0 %v820
    %838 = vmatpush.bf16.msra.mxu0 %v819
    %839 = vmatmul.bf16.gmra.mxu0 %v829
    %v840 = vpop.f32.mrf.mxu0
    %v841 = vadd.f32 %v802, %v840
    %v842 = vpop.f32.mrf.mxu0
    %v843 = vadd.f32 %v802, %v842
    %844 = vdwg.mxu0
    %v845 = vadd.f32 %v735, %v841
    %v846 = vadd.f32 %v736, %v843
    %v847 = vsel %vm46, %v845, 0.0
    %848 = vadd.xlane.f32.xlu0 %v847
    %v849 = vpop.xlane.xlu0 %848
    %v850 = vsel %vm46, %v846, 0.0
    %851 = vadd.xlane.f32.xlu0 %v850
    %v852 = vpop.xlane.xlu0 %851
    %v853 = vmul.f32 %v849, %v59
    %v854 = vmul.f32 %v852, %v59
    %v855 = vsub.f32 %v845, %v853
    %v856 = vsub.f32 %v846, %v854
    %v857 = vmul.f32 %v855, %v855
    %v858 = vmul.f32 %v856, %v856
    %v859 = vsel %vm46, %v857, 0.0
    %860 = vadd.xlane.f32.xlu0 %v859
    %v861 = vpop.xlane.xlu0 %860
    %v862 = vsel %vm46, %v858, 0.0
    %863 = vadd.xlane.f32.xlu0 %v862
    %v864 = vpop.xlane.xlu0 %863
    %v865 = vmul.f32 %v861, %v59
    %v866 = vmul.f32 %v864, %v59
    %v867 = vadd.f32 %v865, 1e-12
    %v868 = vadd.f32 %v866, 1e-12
    %v869 = vrsqrt.pop %v867
    %v870 = vmul.f32 %v869, %v867
    %v871 = vmul.f32 %v870, %v869
    %v872 = vmul.f32 0.5, %v871
    %v873 = vsub.f32 1.5, %v872
    %v874 = vmul.f32 %v869, %v873
    %vm875 = vweird.f32 %v867
    %vm876 = vweird.f32 %v869
    %vm877 = vmor %vm875, %vm876
    %v878 = vsel %vm877, %v869, %v874
    %v879 = vrsqrt.pop %v868
    %v880 = vmul.f32 %v879, %v868
    %v881 = vmul.f32 %v880, %v879
    %v882 = vmul.f32 0.5, %v881
    %v883 = vsub.f32 1.5, %v882
    %v884 = vmul.f32 %v879, %v883
    %vm885 = vweird.f32 %v868
    %vm886 = vweird.f32 %v879
    %vm887 = vmor %vm885, %vm886
    %v888 = vsel %vm887, %v879, %v884
    %v889 = vmul.f32 %v855, %v878
    %v890 = vmul.f32 %v856, %v888
    %v891 = vperm.slane %v44, 6
    %v892 = vmul.f32 %v889, %v891
    %v893 = vmul.f32 %v890, %v891
    %v894 = vperm.slane %v44, 7
    %v895 = vadd.f32 %v892, %v894
    %v896 = vadd.f32 %v893, %v894
    %v897 = vpack.c.bf16 %v895, %v895
    %v898 = vpack.c.bf16 %v896, %v896
    %v899 = vperm.slane %v45, 0
    %v902 = vunpack.c.l.b16 %v897
    %v903 = vunpack.c.l.b16 %v898
    %v904 = vrot.slane %v903, 7
    %vm905 = vcmask 1041409
    %v906 = vsel %vm905, %v904, %v902
    %v907 = vpack.c.b16 %v906, %v906
    %908 = vrot.lane.b32.xlu0 %v664, 96
    %v909 = vpop.permute.xlu0 %908
    %910 = vrot.lane.b32.xlu0 %v665, 96
    %v911 = vpop.permute.xlu0 %910
    %v915 = vsel %vm46, %v907, 0
    %917 = vmatpush.bf16.msra.mxu0 0
    %918 = vmatpush.bf16.msra.mxu0 0
    %919 = vmatpush.bf16.msra.mxu0 0
    %920 = vmatpush.bf16.msra.mxu0 0
    %921 = vmatpush.bf16.msra.mxu0 0
    %922 = vmatpush.bf16.msra.mxu0 0
    %923 = vmatpush.bf16.msra.mxu0 %v911
    %924 = vmatpush.bf16.msra.mxu0 %v909
    %925 = vmatmul.bf16.gmra.mxu0 %v915
    %v926 = vpop.f32.mrf.mxu0
    %v927 = vadd.f32 %v899, %v926
    %v928 = vpop.f32.mrf.mxu0
    %929 = vdwg.mxu0
    %v930 = vtanh.pop %v927
    %v931 = vpack.c.bf16 %v930, %v930
    %v932 = vld [vmem:[%s6] sm:$0xf]
    %v933 = vld [vmem:[%s6 + $0x4] sm:$0xf]
    %v934 = vld [vmem:[%s6 + $0x8] sm:$0xf]
    %v935 = vld [vmem:[%s6 + $0xc] sm:$0xf]
    %v936 = vld [vmem:[%s9] sm:$0x1]
    %v938 = vperm.slane %v936, 0
    %v944 = vunpack.c.l.b16 %v932
    %v945 = vunpack.c.l.b16 %v933
    %v946 = vunpack.c.l.b16 %v934
    %v947 = vunpack.c.l.b16 %v935
    %v948 = vpack.c.b16 %v945, %v944
    %v949 = vpack.c.b16 %v947, %v946
    %v953 = vsel %vm46, %v931, 0
    %955 = vmatpush.bf16.msra.mxu0 0
    %956 = vmatpush.bf16.msra.mxu0 0
    %957 = vmatpush.bf16.msra.mxu0 0
    %958 = vmatpush.bf16.msra.mxu0 0
    %959 = vmatpush.bf16.msra.mxu0 0
    %960 = vmatpush.bf16.msra.mxu0 0
    %961 = vmatpush.bf16.msra.mxu0 %v949
    %962 = vmatpush.bf16.msra.mxu0 %v948
    %963 = vmatmul.bf16.gmra.mxu0 %v953
    %v964 = vpop.f32.mrf.mxu0
    %v965 = vadd.f32 %v938, %v964
    %v966 = vpop.f32.mrf.mxu0
    %967 = vdwg.mxu0
    %968 = vst [vmem:[#allocation2] sm:$0x3] %v965
    // Predicated region
    $region46: #{bert_class_forward.1} parent=1 // pred_check
      _
    $region47: #{bert_class_forward.1} parent=1 // pred_check_branch
      %970 = sbr.rel (0) target = $region49
    $region48: #{bert_class_forward.1} parent=1 // pred_region
      %972 = vsyncadd [#allocation3], 0
      %s974 = sshll.u32 [#allocation2], 4
      %s975 = int_to_ptr.vmem [resolvable:$true] %s974
      %s976 = sshll.u32 %s11, 4
      %s977 = int_to_ptr.hbm [resolvable:$true] %s976
      %979 = dma.vmem_to_hbm [thread:$0]  %s975, 32, %s977, [#allocation3]
    $region49: #{bert_class_forward.1} parent=1 // pred_fallthru
      _
    // Predicated region
    $region50: #{bert_class_forward.1} parent=1 // pred_check
      _
    $region51: #{bert_class_forward.1} parent=1 // pred_check_branch
      %981 = sbr.rel (0) target = $region53
    $region52: #{bert_class_forward.1} parent=1 // pred_region
      %983 = dma.done [#allocation3], 32
    $region53: #{bert_class_forward.1} parent=1 // pred_fallthru
      _
    %984 = vsyncpa [#allocation3], 1

</llo_original>
